<compile_context>
chip_gen: v7x
topology: tpu7x:2x2x1
jax: 0.10.0
libtpu: 0.0.40
codegen_flags: <defaults>
</compile_context>

<pallas_src>
import jax
import jax.numpy as jnp
from jax import lax
from jax.experimental import pallas as pl
from jax.experimental.pallas import tpu as pltpu


_BATCH_UNROLL = 2  # fori_loop unroll over batch elements inside a block


def semantic_tokens_kernel(w_ref, x_ref, o_ref, m_sc, l_sc, acc_sc):
    # w_ref  : (L, C)        1x1 conv weight (dense matrix over channels)
    # x_ref  : (Bt, C, Nt)   block of batch elements / spatial chunk
    # o_ref  : (Bt, L, C)    output tokens for those batch elements
    # m_sc   : (Bt, L, 1)    running row max        (f32 scratch)
    # l_sc   : (Bt, L, 1)    running row exp-sum    (f32 scratch)
    # acc_sc : (Bt, C, L)    running unnormalized tokens^T (f32 scratch)
    n_idx = pl.program_id(1)
    n_last = pl.num_programs(1) - 1
    bt = x_ref.shape[0]
    unroll = min(bt, _BATCH_UNROLL)

    @pl.when(n_idx == 0)
    def _():
        m_sc[...] = jnp.full(m_sc.shape, -jnp.inf, m_sc.dtype)
        l_sc[...] = jnp.zeros(l_sc.shape, l_sc.dtype)
        acc_sc[...] = jnp.zeros(acc_sc.shape, acc_sc.dtype)

    w = w_ref[...]                                              # (L, C)

    def body(b, carry):
        xb = x_ref[b]                                           # (C, Nt)

        # 1x1 conv == matmul over channels: canonical (L,C) x (C,Nt), no relayout of x.
        scores = jnp.dot(w, xb, preferred_element_type=jnp.float32)   # (L, Nt) f32

        # online (flash-style) softmax statistics over the spatial axis
        m_old = m_sc[b]                                         # (L, 1)
        m_new = jnp.maximum(m_old, jnp.max(scores, axis=-1, keepdims=True))
        alpha = jnp.exp(m_old - m_new)                          # (L, 1)
        p = jnp.exp(scores - m_new)                             # (L, Nt) f32, unnormalized
        l_sc[b] = alpha * l_sc[b] + jnp.sum(p, axis=-1, keepdims=True)

        # tokens^T contribution: x stays the canonical (M=C, K=Nt) operand, only the
        # small (L, Nt) p tile is transposed by the MXU lowering. Normalization is
        # deferred to the finalize step (exact divide on the tiny (C, L) result).
        contrib = lax.dot_general(
            xb, p.astype(xb.dtype),
            dimension_numbers=(((1,), (1,)), ((), ())),
            preferred_element_type=jnp.float32)                 # (C, L) f32

        acc_sc[b] = acc_sc[b] * alpha.T + contrib               # rescale + accumulate
        m_sc[b] = m_new
        return carry

    lax.fori_loop(0, bt, body, None, unroll=unroll)

    @pl.when(n_idx == n_last)
    def _():
        def finalize(b, carry):
            inv = 1.0 / l_sc[b]                                 # (L, 1) exact reciprocal
            # tiny (C, L) -> (L, C) transpose; output is small (~L/N of x traffic).
            # NOTE: with C < 128 these are masked partial stores; secondary cost.
            o_ref[b] = (acc_sc[b] * inv.T).T.astype(o_ref.dtype)
            return carry
        lax.fori_loop(0, bt, finalize, None, unroll=unroll)


def _round_up(v, m):
    return -(-v // m) * m


def _vmem_bytes_estimate(bt, C, nt, L, in_itemsize, out_itemsize, unroll):
    """Padded-layout VMEM estimate for one grid step (inputs/outputs double-buffered,
    weight single-buffered, f32 intermediates scaled by the in-kernel unroll factor)."""
    Cs = _round_up(C, 8)
    Ls = _round_up(L, 8)
    Cl = _round_up(C, 128)
    Ll = _round_up(L, 128)
    ntl = _round_up(nt, 128)
    x_blk = bt * Cs * ntl * in_itemsize
    w_blk = Ls * Cl * in_itemsize                   # constant index_map -> single buffer
    o_blk = bt * Ls * Cl * out_itemsize
    scratch = bt * (2 * Ls * 128 * 4 + Cs * Ll * 4)  # m, l, acc (f32, live whole call)
    interm = unroll * (3 * Ls * ntl * 4 + 2 * Cs * Ll * 4)
    return 2 * x_blk + 2 * o_blk + w_blk + scratch + interm


def _tpu_vmem_capacity_bytes():
    try:
        return int(pltpu.get_tpu_info().vmem_capacity_bytes)
    except Exception:
        return 64 * 1024 * 1024  # conservative (v7x-sized) fallback


def _choose_blocks(B, C, N, L, in_itemsize, out_itemsize):
    cap = _tpu_vmem_capacity_bytes()
    if cap <= 72 * 1024 * 1024:
        # v7x-class: 64 MiB VMEM per TensorCore, 2 TCs -> tight budget, >=2 steps per TC.
        budget = 26 * 1024 * 1024
        min_steps = 4
        limit_cap = int(cap * 0.85)
    else:
        # v5e / v6e: 128 MiB VMEM, single TC -> bigger blocks amortize per-step overhead.
        budget = 88 * 1024 * 1024
        min_steps = 2
        limit_cap = min(100 * 1024 * 1024, int(cap * 0.85))

    def fits(bt, nt):
        return _vmem_bytes_estimate(bt, C, nt, L, in_itemsize, out_itemsize,
                                    min(bt, _BATCH_UNROLL)) <= budget

    if fits(1, N):
        nt = N
        bt_max = 1
        while bt_max < B and fits(bt_max + 1, N):
            bt_max += 1
        # keep the grid at least min_steps deep so the block DMAs actually pipeline
        bt = max(1, min(bt_max, -(-B // min_steps)))
    else:
        # even one batch element doesn't fit: split the spatial axis (online softmax)
        bt = 1
        cands = [d for d in range(128, N, 128) if N % d == 0 and fits(1, d)]
        if cands:
            nt = max(cands)
        elif N % 128 == 0:
            nt = 128
        else:
            nt = N  # TODO(synk): mask a ragged spatial tail instead of requiring N%128==0
    return bt, nt, limit_cap


def semantic_tokens(x, weight, *, compute_dtype=jnp.bfloat16,
                    batch_block=None, spatial_block=None):
    """x: (B, C, N), weight: (L, C)  ->  tokens: (B, L, C) in x.dtype.

    compute_dtype=None keeps the full f32 path; default bf16 halves HBM traffic and
    uses the native MXU dtype (softmax math / accumulation stay f32; normalization is
    an exact f32 divide on the final (C, L) tile)."""
    B, C, N = x.shape
    L, Cw = weight.shape
    assert C == Cw, "weight/input channel mismatch"

    out_dtype = x.dtype
    if compute_dtype is not None:
        x = x.astype(compute_dtype)
        weight = weight.astype(compute_dtype)

    in_itemsize = jnp.dtype(x.dtype).itemsize
    out_itemsize = jnp.dtype(out_dtype).itemsize

    bt_auto, nt_auto, limit_cap = _choose_blocks(B, C, N, L, in_itemsize, out_itemsize)
    bt = batch_block if batch_block is not None else bt_auto
    nt = spatial_block if spatial_block is not None else nt_auto
    assert N % nt == 0 and (nt == N or nt % 128 == 0), \
        "spatial_block must divide N and be 128-lane aligned (or equal N)"

    # Pad the batch so bt divides it (zero rows -> softmax stays well-defined; sliced off).
    B_pad = -(-B // bt) * bt
    if B_pad != B:
        x = jnp.pad(x, ((0, B_pad - B), (0, 0), (0, 0)))

    grid = (B_pad // bt, N // nt)

    est = _vmem_bytes_estimate(bt, C, nt, L, in_itemsize, out_itemsize,
                               min(bt, _BATCH_UNROLL))
    vmem_limit = int(min(limit_cap, max(32 * 1024 * 1024, int(est * 1.5))))

    out = pl.pallas_call(
        semantic_tokens_kernel,
        out_shape=jax.ShapeDtypeStruct((B_pad, L, C), out_dtype),
        grid_spec=pltpu.PrefetchScalarGridSpec(
            num_scalar_prefetch=0,
            grid=grid,
            in_specs=[
                pl.BlockSpec((L, C), lambda i, n: (0, 0)),          # weight (resident)
                pl.BlockSpec((bt, C, nt), lambda i, n: (i, 0, n)),  # x block
            ],
            out_specs=pl.BlockSpec((bt, L, C), lambda i, n: (i, 0, 0)),
            scratch_shapes=[
                pltpu.VMEM((bt, L, 1), jnp.float32),   # running max
                pltpu.VMEM((bt, L, 1), jnp.float32),   # running exp-sum
                pltpu.VMEM((bt, C, L), jnp.float32),   # unnormalized tokens^T
            ],
        ),
        compiler_params=pltpu.CompilerParams(
            dimension_semantics=("parallel", "arbitrary"),
            vmem_limit_bytes=vmem_limit,
        ),
    )(weight, x)
    return out[:B] if B_pad != B else out


def semantic_tokens_ref(x, weight):
    # Pure-JAX f32 reference mirroring the PyTorch module exactly.
    scores = jnp.einsum('lc,bcn->bln', weight, x)
    attn = jax.nn.softmax(scores, axis=-1)
    return jnp.einsum('bln,bcn->blc', attn, x)


if __name__ == "__main__":
    # Module defaults: channel=64, token_len=16; N = flattened spatial (16 x 16).
    B, C, N, L = 2, 64, 256, 16

    key = jax.random.PRNGKey(0)
    kx, kw = jax.random.split(key)
    x = jax.random.normal(kx, (B, C, N), dtype=jnp.float32)
    # Deterministic Conv2d(C -> L, k=1, bias=False) weight, reshaped (L, C, 1, 1) -> (L, C).
    weight = (jax.random.normal(kw, (L, C), dtype=jnp.float32)
              * (1.0 / jnp.sqrt(jnp.float32(C))))

    out = jax.block_until_ready(semantic_tokens(x, weight))
    ref = semantic_tokens_ref(x, weight)

    assert out.shape == (B, L, C)
    # bf16 matmul inputs are the dominant error source vs the f32 reference (softmax
    # normalization is now an exact f32 divide); compare at bf16-appropriate tolerances.
    max_err = float(jnp.max(jnp.abs(out - ref)))
    assert jnp.allclose(out, ref, atol=5e-2, rtol=5e-2), (
        f"mismatch vs pure-JAX reference (max |err| = {max_err})")

    print("KERNEL_OK")
</pallas_src>

<mosaic_0001>
module attributes {stable_mosaic.version = 11 : i64} {
  func.func @semantic_tokens_kernel(%arg0: i32, %arg1: i32, %arg2: memref<16x64xbf16, #tpu.memory_space<vmem>>, %arg3: memref<1x64x256xbf16, #tpu.memory_space<vmem>>, %arg4: memref<1x16x64xf32, #tpu.memory_space<vmem>>, %arg5: memref<1x16x1xf32, #tpu.memory_space<vmem>>, %arg6: memref<1x16x1xf32, #tpu.memory_space<vmem>>, %arg7: memref<1x64x16xf32, #tpu.memory_space<vmem>>) attributes {dimension_semantics = [#tpu.dimension_semantics<parallel>, #tpu.dimension_semantics<arbitrary>], iteration_bounds = array<i64: 2, 1>, scalar_prefetch = 0 : i64, scratch_operands = 3 : i64, tpu.core_type = #tpu.core_type<tc>, window_params = [{pipeline_mode = #tpu.pipeline_mode<synchronous>, transform_indices = @transform_0, window_bounds = array<i64: 16, 64>}, {transform_indices = @transform_1, window_bounds = array<i64: 1, 64, 256>}, {transform_indices = @transform_2, window_bounds = array<i64: 1, 16, 64>}]} {
    %c0_i32 = arith.constant 0 : i32
    %0 = arith.cmpi eq, %arg1, %c0_i32 : i32
    %1 = arith.extui %0 : i1 to i32
    %c0_i32_0 = arith.constant 0 : i32
    %2 = arith.cmpi ne, %1, %c0_i32_0 : i32
    scf.if %2 {
      %cst_22 = arith.constant 0xFF800000 : f32
      %50 = vector.broadcast %cst_22 : f32 to vector<1x16x1xf32>
      %c0_23 = arith.constant 0 : index
      %c0_24 = arith.constant 0 : index
      %c0_25 = arith.constant 0 : index
      %51 = vector.load %arg5[%c0_23, %c0_24, %c0_25] : memref<1x16x1xf32, #tpu.memory_space<vmem>>, vector<1x16x1xf32>
      tpu.vector_store %arg5[%c0_23, %c0_24, %c0_25], %50 {strides = array<i32>} : memref<1x16x1xf32, #tpu.memory_space<vmem>>, vector<1x16x1xf32>,
      %cst_26 = arith.constant 0.000000e+00 : f32
      %52 = vector.broadcast %cst_26 : f32 to vector<1x16x1xf32>
      %c0_27 = arith.constant 0 : index
      %c0_28 = arith.constant 0 : index
      %c0_29 = arith.constant 0 : index
      %53 = vector.load %arg6[%c0_27, %c0_28, %c0_29] : memref<1x16x1xf32, #tpu.memory_space<vmem>>, vector<1x16x1xf32>
      tpu.vector_store %arg6[%c0_27, %c0_28, %c0_29], %52 {strides = array<i32>} : memref<1x16x1xf32, #tpu.memory_space<vmem>>, vector<1x16x1xf32>,
      %cst_30 = arith.constant 0.000000e+00 : f32
      %54 = vector.broadcast %cst_30 : f32 to vector<1x64x16xf32>
      %c0_31 = arith.constant 0 : index
      %c0_32 = arith.constant 0 : index
      %c0_33 = arith.constant 0 : index
      %55 = vector.load %arg7[%c0_31, %c0_32, %c0_33] : memref<1x64x16xf32, #tpu.memory_space<vmem>>, vector<1x64x16xf32>
      tpu.vector_store %arg7[%c0_31, %c0_32, %c0_33], %54 {strides = array<i32>} : memref<1x64x16xf32, #tpu.memory_space<vmem>>, vector<1x64x16xf32>,
    } else {
    }
    %c0 = arith.constant 0 : index
    %c0_1 = arith.constant 0 : index
    %3 = vector.load %arg2[%c0, %c0_1] : memref<16x64xbf16, #tpu.memory_space<vmem>>, vector<16x64xbf16>
    %c0_i32_2 = arith.constant 0 : i32
    %4 = arith.index_cast %c0_i32_2 : i32 to index
    %c0_3 = arith.constant 0 : index
    %c0_4 = arith.constant 0 : index
    %5 = vector.load %arg3[%4, %c0_3, %c0_4] : memref<1x64x256xbf16, #tpu.memory_space<vmem>>, vector<1x64x256xbf16>
    %6 = vector.shape_cast %5 : vector<1x64x256xbf16> to vector<64x256xbf16>
    %cst = arith.constant dense<0.000000e+00> : vector<16x256xf32>
    %7 = tpu.matmul %3, %6, %cst {dimension_numbers = #tpu.dot_dimension_numbers<[1], [0], [0], [1], [0, 0, 1, 1], [], []>} : vector<16x64xbf16>, vector<64x256xbf16>, vector<16x256xf32> -> vector<16x256xf32>
    %8 = arith.index_cast %c0_i32_2 : i32 to index
    %c0_5 = arith.constant 0 : index
    %c0_6 = arith.constant 0 : index
    %9 = vector.load %arg5[%8, %c0_5, %c0_6] : memref<1x16x1xf32, #tpu.memory_space<vmem>>, vector<1x16x1xf32>
    %10 = vector.shape_cast %9 : vector<1x16x1xf32> to vector<16x1xf32>
    %cst_7 = arith.constant dense<0xFF800000> : vector<16xf32>
    %11 = vector.multi_reduction <maximumf>, %7, %cst_7 [1] : vector<16x256xf32> to vector<16xf32>
    %12 = vector.shape_cast %11 : vector<16xf32> to vector<16x1xf32>
    %13 = arith.maximumf %10, %12 : vector<16x1xf32>
    %14 = arith.subf %10, %13 : vector<16x1xf32>
    %15 = math.exp %14 : vector<16x1xf32>
    %16 = vector.broadcast %13 : vector<16x1xf32> to vector<16x256xf32>
    %17 = arith.subf %7, %16 : vector<16x256xf32>
    %18 = math.exp %17 : vector<16x256xf32>
    %19 = arith.index_cast %c0_i32_2 : i32 to index
    %c0_8 = arith.constant 0 : index
    %c0_9 = arith.constant 0 : index
    %20 = vector.load %arg6[%19, %c0_8, %c0_9] : memref<1x16x1xf32, #tpu.memory_space<vmem>>, vector<1x16x1xf32>
    %21 = vector.shape_cast %20 : vector<1x16x1xf32> to vector<16x1xf32>
    %22 = arith.mulf %15, %21 : vector<16x1xf32>
    %cst_10 = arith.constant dense<0.000000e+00> : vector<16xf32>
    %23 = vector.multi_reduction <add>, %18, %cst_10 [1] : vector<16x256xf32> to vector<16xf32>
    %24 = vector.shape_cast %23 : vector<16xf32> to vector<16x1xf32>
    %25 = arith.addf %22, %24 : vector<16x1xf32>
    %26 = arith.index_cast %c0_i32_2 : i32 to index
    %c0_11 = arith.constant 0 : index
    %c0_12 = arith.constant 0 : index
    %27 = vector.load %arg6[%26, %c0_11, %c0_12] : memref<1x16x1xf32, #tpu.memory_space<vmem>>, vector<1x16x1xf32>
    %28 = vector.shape_cast %27 : vector<1x16x1xf32> to vector<16x1xf32>
    %29 = vector.shape_cast %25 : vector<16x1xf32> to vector<1x16x1xf32>
    tpu.vector_store %arg6[%26, %c0_11, %c0_12], %29 {strides = array<i32>} : memref<1x16x1xf32, #tpu.memory_space<vmem>>, vector<1x16x1xf32>,
    %30 = arith.truncf %18 : vector<16x256xf32> to vector<16x256xbf16>
    %cst_13 = arith.constant dense<0.000000e+00> : vector<64x16xf32>
    %31 = tpu.matmul %6, %30, %cst_13 {dimension_numbers = #tpu.dot_dimension_numbers<[1], [1], [0], [0], [0, 0, 1, 0], [], []>} : vector<64x256xbf16>, vector<16x256xbf16>, vector<64x16xf32> -> vector<64x16xf32>
    %32 = arith.index_cast %c0_i32_2 : i32 to index
    %c0_14 = arith.constant 0 : index
    %c0_15 = arith.constant 0 : index
    %33 = vector.load %arg7[%32, %c0_14, %c0_15] : memref<1x64x16xf32, #tpu.memory_space<vmem>>, vector<1x64x16xf32>
    %34 = vector.shape_cast %33 : vector<1x64x16xf32> to vector<64x16xf32>
    %35 = tpu.transpose %15, [1, 0] : vector<16x1xf32> -> vector<1x16xf32>
    %36 = vector.broadcast %35 : vector<1x16xf32> to vector<64x16xf32>
    %37 = arith.mulf %34, %36 : vector<64x16xf32>
    %38 = arith.addf %37, %31 : vector<64x16xf32>
    %39 = arith.index_cast %c0_i32_2 : i32 to index
    %c0_16 = arith.constant 0 : index
    %c0_17 = arith.constant 0 : index
    %40 = vector.load %arg7[%39, %c0_16, %c0_17] : memref<1x64x16xf32, #tpu.memory_space<vmem>>, vector<1x64x16xf32>
    %41 = vector.shape_cast %40 : vector<1x64x16xf32> to vector<64x16xf32>
    %42 = vector.shape_cast %38 : vector<64x16xf32> to vector<1x64x16xf32>
    tpu.vector_store %arg7[%39, %c0_16, %c0_17], %42 {strides = array<i32>} : memref<1x64x16xf32, #tpu.memory_space<vmem>>, vector<1x64x16xf32>,
    %43 = arith.index_cast %c0_i32_2 : i32 to index
    %c0_18 = arith.constant 0 : index
    %c0_19 = arith.constant 0 : index
    %44 = vector.load %arg5[%43, %c0_18, %c0_19] : memref<1x16x1xf32, #tpu.memory_space<vmem>>, vector<1x16x1xf32>
    %45 = vector.shape_cast %44 : vector<1x16x1xf32> to vector<16x1xf32>
    %46 = vector.shape_cast %13 : vector<16x1xf32> to vector<1x16x1xf32>
    tpu.vector_store %arg5[%43, %c0_18, %c0_19], %46 {strides = array<i32>} : memref<1x16x1xf32, #tpu.memory_space<vmem>>, vector<1x16x1xf32>,
    %c1_i32 = arith.constant 1 : i32
    %c0_i32_20 = arith.constant 0 : i32
    %47 = arith.cmpi eq, %arg1, %c0_i32_20 : i32
    %48 = arith.extui %47 : i1 to i32
    %c0_i32_21 = arith.constant 0 : i32
    %49 = arith.cmpi ne, %48, %c0_i32_21 : i32
    scf.if %49 {
      %c0_i32_22 = arith.constant 0 : i32
      %50 = arith.index_cast %c0_i32_22 : i32 to index
      %c0_23 = arith.constant 0 : index
      %c0_24 = arith.constant 0 : index
      %51 = vector.load %arg6[%50, %c0_23, %c0_24] : memref<1x16x1xf32, #tpu.memory_space<vmem>>, vector<1x16x1xf32>
      %52 = vector.shape_cast %51 : vector<1x16x1xf32> to vector<16x1xf32>
      %cst_25 = arith.constant 1.000000e+00 : f32
      %53 = vector.broadcast %cst_25 : f32 to vector<16x1xf32>
      %54 = arith.divf %53, %52 : vector<16x1xf32>
      %55 = arith.index_cast %c0_i32_22 : i32 to index
      %c0_26 = arith.constant 0 : index
      %c0_27 = arith.constant 0 : index
      %56 = vector.load %arg7[%55, %c0_26, %c0_27] : memref<1x64x16xf32, #tpu.memory_space<vmem>>, vector<1x64x16xf32>
      %57 = vector.shape_cast %56 : vector<1x64x16xf32> to vector<64x16xf32>
      %58 = tpu.transpose %54, [1, 0] : vector<16x1xf32> -> vector<1x16xf32>
      %59 = vector.broadcast %58 : vector<1x16xf32> to vector<64x16xf32>
      %60 = arith.mulf %57, %59 : vector<64x16xf32>
      %61 = tpu.transpose %60, [1, 0] : vector<64x16xf32> -> vector<16x64xf32>
      %62 = arith.index_cast %c0_i32_22 : i32 to index
      %c0_28 = arith.constant 0 : index
      %c0_29 = arith.constant 0 : index
      %63 = vector.load %arg4[%62, %c0_28, %c0_29] : memref<1x16x64xf32, #tpu.memory_space<vmem>>, vector<1x16x64xf32>
      %64 = vector.shape_cast %63 : vector<1x16x64xf32> to vector<16x64xf32>
      %65 = vector.shape_cast %61 : vector<16x64xf32> to vector<1x16x64xf32>
      tpu.vector_store %arg4[%62, %c0_28, %c0_29], %65 {strides = array<i32>} : memref<1x16x64xf32, #tpu.memory_space<vmem>>, vector<1x16x64xf32>,
      %c1_i32_30 = arith.constant 1 : i32
    } else {
    }
    return
  }
  func.func @transform_0(%arg0: i32, %arg1: i32) -> (i32, i32) {
    %c0_i32 = arith.constant 0 : i32
    %c0_i32_0 = arith.constant 0 : i32
    %c0_i32_1 = arith.constant 0 : i32
    return %c0_i32, %c0_i32_0 : i32, i32
  }
  func.func @transform_1(%arg0: i32, %arg1: i32) -> (i32, i32, i32) {
    %c0_i32 = arith.constant 0 : i32
    %c0_i32_0 = arith.constant 0 : i32
    return %arg0, %c0_i32, %arg1 : i32, i32, i32
  }
  func.func @transform_2(%arg0: i32, %arg1: i32) -> (i32, i32, i32) {
    %c0_i32 = arith.constant 0 : i32
    %c0_i32_0 = arith.constant 0 : i32
    %c0_i32_1 = arith.constant 0 : i32
    return %arg0, %c0_i32, %c0_i32_0 : i32, i32, i32
  }
}

</mosaic_0001>

<llo_original>
// kernel: tpu_custom_call.1
$region0: #{tpu_custom_call.1}
  #allocation0 [shape = 'u32[]', space=smem, size = 0x4, offset = 0x4, fixed_abs, tag = 'smem constant byte address 0x4 - core index']
  #allocation1 [shape = 'u32[144,128]{1,0:T(1,128)}', space=vmem, size = 0x12000, scoped, tag = 'internal scratch']
  #allocation2 [shape = 'f32[1,16,1]{2,1,0:T(8,128)}', space=vmem, size = 0x2000, scoped, tag = 'scratch operand']
  #allocation3 [shape = 'f32[1,16,1]{2,1,0:T(8,128)}', space=vmem, size = 0x2000, scoped, tag = 'scratch operand']
  #allocation4 [shape = 'f32[1,64,16]{2,1,0:T(8,128)}', space=vmem, size = 0x8000, scoped, tag = 'scratch operand']
  %s0 = inlined_call_operand.hbm [shape: bf16[16,64], index: 0, kind: input, shape index: {}]
  %s1 = inlined_call_operand.hbm [shape: bf16[2,64,256], index: 1, kind: input, shape index: {}]
  %s2 = inlined_call_operand.hbm [shape: f32[2,16,64], index: 2, kind: output, shape index: {}]
  %s3 = sld [smem:[#allocation0]]
  $region57: #{tpu_custom_call.1} parent=0
    _
  %s5 = ssub.s32 1, %s3
  %s6 = scalar_select 0, %s5, %s3
  $region1: #{tpu_custom_call.1} parent=0
    #allocation5 [shape = 'u8[4096]{0}', space=vmem, size = 0x1000, scoped, tag = 'input window, operand 0, single buffered']
    #allocation6 [shape = 's32[2]{0}', space=sflag, size = 0x8, scoped, tag = 'scoped memory for tpu_custom_call.1']
    #allocation7 [shape = 's32[2]{0}', space=sflag, size = 0x8, scoped, tag = 'scoped memory for tpu_custom_call.1']
    #allocation8 [shape = 'u8[65536]{0}', space=vmem, size = 0x10000, scoped, tag = 'input window, operand 1']
    #allocation9 [shape = 's32[2]{0}', space=sflag, size = 0x8, scoped, tag = 'scoped memory for tpu_custom_call.1']
    #allocation10 [shape = 'u8[16384]{0}', space=vmem, size = 0x4000, scoped, tag = 'output window, operand 0']
    %7 = vsyncpa [#allocation6], 0
    %8 = vsyncpa [#allocation9], 0
    %s9 = scalar_lea.sflag [#allocation9], 1
    %10 = vsyncpa %s9, 0
    %11 = vsyncpa [#allocation7], 0
    %s12 = scalar_lea.sflag [#allocation7], 1
    %13 = vsyncpa %s12, 0
    loop: start=0, step=1, limit=4
    $region2: #{tpu_custom_call.1} parent=1 // loop_pre_header
      _
    $region3: #{tpu_custom_call.1} parent=1 // loop_header
      %s15 = sphi 0, %s19
      %p16 = scmp.ge.s32.totalorder %s15, 4
      %s22 = sphi 0, %s34
      %s23 = sphi 0, %s30
      %s24 = sphi 0, %s22
      %s25 = sphi 0, %s23
      %s26 = sphi 0, %s24
      %s27 = sphi 0, %s25
      %s35 = sphi 0, %s35
      %s37 = sphi 0, %s35
      %s38 = sphi 0, %s37
      %s52 = sphi 0, %s38
      %s60 = sphi 0, %s62
      %s63 = sphi 0, %s60
      %s64 = sphi 0, %s63
      %s80 = sphi 0, %s64
      %s86 = sphi 0, %s88
      %s89 = sphi 0, %s86
      %s90 = sphi 0, %s89
      %s106 = sphi 0, %s90
    $region4: #{tpu_custom_call.1} parent=1 // loop_header_branch
      %18 = sbr.rel (%p16) target = $region8
    $region5: #{tpu_custom_call.1} parent=1 // loop_body
      %s20 = ssub.s32 %s15, 1
      %s21 = ssub.s32 %s15, 2
      %s28 = sadd.s32 1, %s23
      %p29 = scmp.ge.s32.totalorder %s28, 1
      %s30 = scalar_select %p29, 0, %s28
      %s31 = sadd.s32 1, %s22
      %s32 = scalar_select %p29, %s31, %s22
      %p33 = scmp.ge.s32.totalorder %s32, 2
      %s34 = scalar_select %p33, 0, %s32
      %s36 = sadd.s32 %s35, 1
      %p39 = scmp.eq.s32.totalorder %s15, 1
      %p40 = scmp.ne.s32.totalorder %s35, %s37
      %p41 = scmp.eq.s32.totalorder %s15, 0
      %p42 = por %p40, %p41
      %p43 = scmp.ne.s32.totalorder %s35, %s37
      %p44 = scmp.eq.s32.totalorder %s20, 1
      %p45 = por %p43, %p44
      %p46 = scmp.ne.s32.totalorder %s37, %s38
      %p47 = scmp.eq.s32.totalorder %s20, 0
      %p48 = por %p46, %p47
      %p49 = scmp.ne.s32.totalorder %s37, %s38
      %p50 = scmp.eq.s32.totalorder %s21, 1
      %p51 = por %p49, %p50
      %p53 = scmp.ne.s32.totalorder %s38, %s52
      %p54 = scmp.eq.s32.totalorder %s21, 0
      %p55 = por %p53, %p54
      %s56 = ssub.s32 %s22, %s34
      %s57 = ssub.s32 %s23, %s30
      %s58 = sor.u32 %s56, %s57
      %p59 = scmp.eq.s32.totalorder %s58, 0
      %s61 = sadd.s32 %s60, 1
      %s62 = scalar_select %p59, %s60, %s61
      %p65 = pneg %p59
      %p66 = scmp.eq.s32.totalorder %s15, 1
      %p67 = por %p65, %p66
      %p68 = scmp.ne.s32.totalorder %s60, %s63
      %p69 = scmp.eq.s32.totalorder %s15, 0
      %p70 = por %p68, %p69
      %p71 = scmp.ne.s32.totalorder %s60, %s63
      %p72 = scmp.eq.s32.totalorder %s20, 1
      %p73 = por %p71, %p72
      %p74 = scmp.ne.s32.totalorder %s63, %s64
      %p75 = scmp.eq.s32.totalorder %s20, 0
      %p76 = por %p74, %p75
      %p77 = scmp.ne.s32.totalorder %s63, %s64
      %p78 = scmp.eq.s32.totalorder %s21, 1
      %p79 = por %p77, %p78
      %p81 = scmp.ne.s32.totalorder %s64, %s80
      %p82 = scmp.eq.s32.totalorder %s21, 0
      %p83 = por %p81, %p82
      %s84 = ssub.s32 %s22, %s34
      %p85 = scmp.eq.s32.totalorder %s84, 0
      %s87 = sadd.s32 %s86, 1
      %s88 = scalar_select %p85, %s86, %s87
      %p91 = pneg %p85
      %p92 = scmp.eq.s32.totalorder %s15, 1
      %p93 = por %p91, %p92
      %p94 = scmp.ne.s32.totalorder %s86, %s89
      %p95 = scmp.eq.s32.totalorder %s15, 0
      %p96 = por %p94, %p95
      %p97 = scmp.ne.s32.totalorder %s86, %s89
      %p98 = scmp.eq.s32.totalorder %s20, 1
      %p99 = por %p97, %p98
      %p100 = scmp.ne.s32.totalorder %s89, %s90
      %p101 = scmp.eq.s32.totalorder %s20, 0
      %p102 = por %p100, %p101
      %p103 = scmp.ne.s32.totalorder %s89, %s90
      %p104 = scmp.eq.s32.totalorder %s21, 1
      %p105 = por %p103, %p104
      %p107 = scmp.ne.s32.totalorder %s90, %s106
      %p108 = scmp.eq.s32.totalorder %s21, 0
      %p109 = por %p107, %p108
      %p110 = scmp.le.s32.totalorder 1, %s15
      %p111 = scmp.lt.s32.totalorder %s15, 3
      %p112 = pnand %p110, %p111
      %p113 = pneg %p112
      // Predicated region
      $region9: #{tpu_custom_call.1} parent=5 // pred_check
        _
      $region10: #{tpu_custom_call.1} parent=5 // pred_check_branch
        %115 = sbr.rel (%p112) target = $region12
      $region11: #{tpu_custom_call.1} parent=5 // pred_region
        %s116 = ssub.s32 %s15, 1
        // Predicated region
        $region13: #{tpu_custom_call.1} parent=11 // pred_check
          %p117 = pneg %p48
        $region14: #{tpu_custom_call.1} parent=11 // pred_check_branch
          %119 = sbr.rel (%p117) target = $region16
        $region15: #{tpu_custom_call.1} parent=11 // pred_region
          %s121 = ssub.s32 128, 128
          %122 = vsyncadd [#allocation6], %s121
          %s123 = sshll.u32 [#allocation5], 4
          %s124 = int_to_ptr.vmem [resolvable:$true] %s123
          %129 = dma.hbm_to_vmem [thread:$0]  %s0, 128, %s124, [#allocation6], 64, 64, 4
        $region16: #{tpu_custom_call.1} parent=11 // pred_fallthru
          _
      $region12: #{tpu_custom_call.1} parent=5 // pred_fallthru
        _
      %p130 = scmp.lt.s32.totalorder %s15, 2
      // Predicated region
      $region17: #{tpu_custom_call.1} parent=5 // pred_check
        %p131 = pneg %p130
      $region18: #{tpu_custom_call.1} parent=5 // pred_check_branch
        %133 = sbr.rel (%p131) target = $region20
      $region19: #{tpu_custom_call.1} parent=5 // pred_region
        // Predicated region
        $region21: #{tpu_custom_call.1} parent=19 // pred_check
          %p134 = pneg %p70
        $region22: #{tpu_custom_call.1} parent=19 // pred_check_branch
          %136 = sbr.rel (%p134) target = $region24
        $region23: #{tpu_custom_call.1} parent=19 // pred_region
          %s137 = sand.u32 %s60, 1
          %s138 = scalar_lea.sflag [#allocation9], %s137
          %s139 = sand.u32 %s60, 1
          %s140 = smul.addr %s139, 64
          %s141 = scalar_lea.vmem [#allocation8], %s140
          %s142 = smul.u32 2, %s23
          %s144 = ssub.s32 1024, 1024
          %145 = vsyncadd %s138, %s144
          %s146 = smul.addr %s22, 16
          %s147 = sadd.s32 %s142, %s146
          %s148 = smul.addr %s147, 64
          %s149 = scalar_lea.hbm %s1, %s148
          %s150 = sshll.u32 %s141, 4
          %s151 = int_to_ptr.vmem [resolvable:$true] %s150
          %156 = dma.hbm_to_vmem [thread:$0]  %s149, 1024, %s151, %s138, 128, 128, 8
        $region24: #{tpu_custom_call.1} parent=19 // pred_fallthru
          _
      $region20: #{tpu_custom_call.1} parent=5 // pred_fallthru
        _
      %p157 = scmp.le.s32.totalorder 1, %s15
      %p158 = scmp.lt.s32.totalorder %s15, 3
      %p159 = pnand %p157, %p158
      %p160 = pneg %p159
      // Predicated region
      $region25: #{tpu_custom_call.1} parent=5 // pred_check
        _
      $region26: #{tpu_custom_call.1} parent=5 // pred_check_branch
        %162 = sbr.rel (%p159) target = $region28
      $region27: #{tpu_custom_call.1} parent=5 // pred_region
        %s163 = ssub.s32 %s15, 1
        // Predicated region
        $region29: #{tpu_custom_call.1} parent=27 // pred_check
          %p164 = pneg %p48
        $region30: #{tpu_custom_call.1} parent=27 // pred_check_branch
          %166 = sbr.rel (%p164) target = $region32
        $region31: #{tpu_custom_call.1} parent=27 // pred_region
          %167 = dma.done [#allocation6], 128
        $region32: #{tpu_custom_call.1} parent=27 // pred_fallthru
          _
        %s168 = sand.u32 %s63, 1
        %s169 = scalar_lea.sflag [#allocation9], %s168
        %s170 = sand.u32 %s63, 1
        %s171 = smul.addr %s170, 64
        %s172 = scalar_lea.vmem [#allocation8], %s171
        // Predicated region
        $region33: #{tpu_custom_call.1} parent=27 // pred_check
          %p173 = pneg %p76
        $region34: #{tpu_custom_call.1} parent=27 // pred_check_branch
          %175 = sbr.rel (%p173) target = $region36
        $region35: #{tpu_custom_call.1} parent=27 // pred_region
          %176 = dma.done %s169, 1024
        $region36: #{tpu_custom_call.1} parent=27 // pred_fallthru
          _
        %p177 = pneg %p48
        %p178 = pneg %p45
        %s179 = sand.u32 %s63, 1
        %s180 = scalar_lea.sflag [#allocation9], %s179
        %s181 = sand.u32 %s63, 1
        %s182 = smul.addr %s181, 64
        %s183 = scalar_lea.vmem [#allocation8], %s182
        %p184 = pneg %p76
        %p185 = pneg %p73
        %p186 = pneg %p102
        %p187 = pneg %p99
        %s188 = sand.u32 %s89, 1
        %s189 = scalar_lea.sflag [#allocation7], %s188
        %s190 = sand.u32 %s89, 1
        %s191 = smul.addr %s190, 16
        %s192 = scalar_lea.vmem [#allocation10], %s191
        %s193 = smul.u32 2, %s25
        %p195 = scmp.eq.s32.totalorder %s25, 0
        // Predicated region
        $region37: #{tpu_custom_call.1} parent=27 // pred_check
          %p196 = pneg %p195
        $region38: #{tpu_custom_call.1} parent=27 // pred_check_branch
          %198 = sbr.rel (%p196) target = $region40
        $region39: #{tpu_custom_call.1} parent=27 // pred_region
          %vm199 = vcmask 7168
          %200 = vst.msk [vmem:[#allocation2] sm:$0xff] %vm199, -inf
          %201 = vst.msk [vmem:[#allocation2 + $0x8] sm:$0xff] %vm199, -inf
          %202 = vst.msk [vmem:[#allocation3] sm:$0xff] %vm199, 0.0
          %203 = vst.msk [vmem:[#allocation3 + $0x8] sm:$0xff] %vm199, 0.0
          %vm204 = vcmask 130048
          %205 = vst.msk [vmem:[#allocation4] sm:$0xff] %vm204, 0.0
          %206 = vst.msk [vmem:[#allocation4 + $0x8] sm:$0xff] %vm204, 0.0
          %207 = vst.msk [vmem:[#allocation4 + $0x10] sm:$0xff] %vm204, 0.0
          %208 = vst.msk [vmem:[#allocation4 + $0x18] sm:$0xff] %vm204, 0.0
          %209 = vst.msk [vmem:[#allocation4 + $0x20] sm:$0xff] %vm204, 0.0
          %210 = vst.msk [vmem:[#allocation4 + $0x28] sm:$0xff] %vm204, 0.0
          %211 = vst.msk [vmem:[#allocation4 + $0x30] sm:$0xff] %vm204, 0.0
          %212 = vst.msk [vmem:[#allocation4 + $0x38] sm:$0xff] %vm204, 0.0
        $region40: #{tpu_custom_call.1} parent=27 // pred_fallthru
          _
        %v213 = vld [vmem:[#allocation5] sm:$0xf]
        %v214 = vld [vmem:[#allocation5 + $0x4] sm:$0xf]
        %v215 = vld [vmem:[%s172] sm:$0xff]
        %v216 = vld [vmem:[%s172 + $0x8] sm:$0xff]
        %v217 = vld [vmem:[%s172 + $0x10] sm:$0xff]
        %v218 = vld [vmem:[%s172 + $0x18] sm:$0xff]
        %v219 = vld [vmem:[%s172 + $0x20] sm:$0xff]
        %v220 = vld [vmem:[%s172 + $0x28] sm:$0xff]
        %v221 = vld [vmem:[%s172 + $0x30] sm:$0xff]
        %v222 = vld [vmem:[%s172 + $0x38] sm:$0xff]
        %v225 = vunpack.c.l.b16 %v213
        %v226 = vunpack.c.l.b16 %v214
        %v227 = vpack.c.b16 %v226, %v225
        %v236 = vunpack.c.l.b16 %v215
        %v237 = vunpack.c.h.b16 %v215
        %v238 = vunpack.c.l.b16 %v216
        %v239 = vunpack.c.h.b16 %v216
        %v240 = vunpack.c.l.b16 %v217
        %v241 = vunpack.c.h.b16 %v217
        %v242 = vunpack.c.l.b16 %v218
        %v243 = vunpack.c.h.b16 %v218
        %v244 = vunpack.c.l.b16 %v219
        %v245 = vunpack.c.h.b16 %v219
        %v246 = vunpack.c.l.b16 %v220
        %v247 = vunpack.c.h.b16 %v220
        %v248 = vunpack.c.l.b16 %v221
        %v249 = vunpack.c.h.b16 %v221
        %v250 = vunpack.c.l.b16 %v222
        %v251 = vunpack.c.h.b16 %v222
        %v252 = vpack.c.b16 %v238, %v236
        %v253 = vpack.c.b16 %v239, %v237
        %v254 = vpack.c.b16 %v242, %v240
        %v255 = vpack.c.b16 %v243, %v241
        %v256 = vpack.c.b16 %v246, %v244
        %v257 = vpack.c.b16 %v247, %v245
        %v258 = vpack.c.b16 %v250, %v248
        %v259 = vpack.c.b16 %v251, %v249
        %vm268 = vcmask 523264
        %v270 = vsel %vm268, %v227, 0
        %272 = vmatprep.subr.bf16.mxu0 %v253
        %273 = vmatpush1.bf16.msra.mxu0 %v252
        %274 = vmatprep.subr.bf16.mxu0 %v255
        %275 = vmatpush1.bf16.msra.mxu0 %v254
        %276 = vmatprep.subr.bf16.mxu0 %v257
        %277 = vmatpush1.bf16.msra.mxu0 %v256
        %278 = vmatprep.subr.bf16.mxu0 %v259
        %279 = vmatpush1.bf16.msra.mxu0 %v258
        %280 = vmatprep.subr.bf16.mxu0 0
        %281 = vmatpush1.bf16.msra.mxu0 0
        %282 = vmatprep.subr.bf16.mxu0 0
        %283 = vmatpush1.bf16.msra.mxu0 0
        %284 = vmatprep.subr.bf16.mxu0 0
        %285 = vmatpush1.bf16.msra.mxu0 0
        %286 = vmatprep.subr.bf16.mxu0 0
        %287 = vmatpush1.bf16.msra.mxu0 0
        %288 = vmatprep.subr.bf16.mxu0 0
        %289 = vmatpush1.bf16.msra.mxu0 0
        %290 = vmatprep.subr.bf16.mxu0 0
        %291 = vmatpush1.bf16.msra.mxu0 0
        %292 = vmatprep.subr.bf16.mxu0 0
        %293 = vmatpush1.bf16.msra.mxu0 0
        %294 = vmatprep.subr.bf16.mxu0 0
        %295 = vmatpush1.bf16.msra.mxu0 0
        %296 = vmatprep.subr.bf16.mxu0 0
        %297 = vmatpush1.bf16.msra.mxu0 0
        %298 = vmatprep.subr.bf16.mxu0 0
        %299 = vmatpush1.bf16.msra.mxu0 0
        %300 = vmatprep.subr.bf16.mxu0 0
        %301 = vmatpush1.bf16.msra.mxu0 0
        %302 = vmatprep.subr.bf16.mxu0 0
        %303 = vmatpush1.bf16.msra.mxu0 0
        %304 = vmatprep.mubr.bf16.mxu0 0
        %305 = vmatmul.mubr.bf16.gmra.mrb[0].mxu0 %v270
        %v306 = vpop.f32.mrb[0].mxu0
        %v307 = vadd.f32 0.0, %v306
        %v308 = vpop.f32.mrb[0].mxu0
        %v309 = vadd.f32 0.0, %v308
        %v310 = vpop.f32.mrb[0].mxu0
        %v311 = vadd.f32 0.0, %v310
        %v312 = vpop.f32.mrb[0].mxu0
        %v313 = vadd.f32 0.0, %v312
        %314 = vdwg.mxu0
        %v315 = vld [vmem:[#allocation2] sm:$0xff]
        %v316 = vld [vmem:[#allocation2 + $0x8] sm:$0xff]
        %v317 = vmax.f32 %v307, %v309
        %318 = vmax.xlane.f32.xlu0 %v317
        %v319 = vpop.xlane.xlu0 %318
        %v320 = vmax.f32 %v311, %v313
        %321 = vmax.xlane.f32.xlu0 %v320
        %v322 = vpop.xlane.xlu0 %321
        %v323 = vmax.f32 %v315, %v319
        %v324 = vmax.f32 %v316, %v322
        %v325 = vsub.f32 %v315, %v323
        %v326 = vsub.f32 %v316, %v324
        %v327 = vmul.f32 %v325, 1.442695
        %v328 = vpow.pop %v327
        %v329 = vmul.f32 %v326, 1.442695
        %v330 = vpow.pop %v329
        %332 = vset.pattern.permute.xlu0 0
        %333 = vperm.xlu0 %332, %v323
        %v334 = vpop.permute.xlu0 %333
        %337 = vset.pattern.permute.xlu0 0
        %338 = vperm.xlu0 %337, %v324
        %v339 = vpop.permute.xlu0 %338
        %v341 = vsub.f32 %v307, %v334
        %v342 = vsub.f32 %v309, %v334
        %v343 = vsub.f32 %v311, %v339
        %v344 = vsub.f32 %v313, %v339
        %v345 = vmul.f32 %v341, 1.442695
        %v346 = vpow.pop %v345
        %v347 = vmul.f32 %v342, 1.442695
        %v348 = vpow.pop %v347
        %v349 = vmul.f32 %v343, 1.442695
        %v350 = vpow.pop %v349
        %v351 = vmul.f32 %v344, 1.442695
        %v352 = vpow.pop %v351
        %v353 = vld [vmem:[#allocation3] sm:$0xff]
        %v354 = vld [vmem:[#allocation3 + $0x8] sm:$0xff]
        %v355 = vmul.f32 %v328, %v353
        %v356 = vmul.f32 %v330, %v354
        %v357 = vadd.f32 %v346, %v348
        %358 = vadd.xlane.f32.xlu0 %v357
        %v359 = vpop.xlane.xlu0 %358
        %v360 = vadd.f32 %v350, %v352
        %361 = vadd.xlane.f32.xlu0 %v360
        %v362 = vpop.xlane.xlu0 %361
        %v363 = vadd.f32 %v355, %v359
        %v364 = vadd.f32 %v356, %v362
        %vm365 = vcmask 7168
        %366 = vst.msk [vmem:[#allocation3] sm:$0xff] %vm365, %v363
        %367 = vst.msk [vmem:[#allocation3 + $0x8] sm:$0xff] %vm365, %v364
        %v368 = vpack.c.bf16 %v350, %v346
        %v369 = vpack.c.bf16 %v352, %v348
        %370 = vmatprep.subr.bf16.mxu0 %v369
        %371 = vmatpush1.bf16.xpose.msra.mxu0 %v368
        %372 = vmatprep.subr.bf16.mxu0 0
        %373 = vmatpush1.bf16.xpose.msra.mxu0 0
        %374 = vmatprep.subr.bf16.mxu0 0
        %375 = vmatpush1.bf16.xpose.msra.mxu0 0
        %376 = vmatprep.subr.bf16.mxu0 0
        %377 = vmatpush1.bf16.xpose.msra.mxu0 0
        %378 = vmatprep.subr.bf16.mxu0 0
        %379 = vmatpush1.bf16.xpose.msra.mxu0 0
        %380 = vmatprep.subr.bf16.mxu0 0
        %381 = vmatpush1.bf16.xpose.msra.mxu0 0
        %382 = vmatprep.subr.bf16.mxu0 0
        %383 = vmatpush1.bf16.xpose.msra.mxu0 0
        %384 = vmatprep.subr.bf16.mxu0 0
        %385 = vmatpush1.bf16.xpose.msra.mxu0 0
        %386 = vmatprep.subr.bf16.mxu0 0
        %387 = vmatpush1.bf16.xpose.msra.mxu0 0
        %388 = vmatprep.subr.bf16.mxu0 0
        %389 = vmatpush1.bf16.xpose.msra.mxu0 0
        %390 = vmatprep.subr.bf16.mxu0 0
        %391 = vmatpush1.bf16.xpose.msra.mxu0 0
        %392 = vmatprep.subr.bf16.mxu0 0
        %393 = vmatpush1.bf16.xpose.msra.mxu0 0
        %394 = vmatprep.subr.bf16.mxu0 0
        %395 = vmatpush1.bf16.xpose.msra.mxu0 0
        %396 = vmatprep.subr.bf16.mxu0 0
        %397 = vmatpush1.bf16.xpose.msra.mxu0 0
        %398 = vmatprep.subr.bf16.mxu0 0
        %399 = vmatpush1.bf16.xpose.msra.mxu0 0
        %400 = vmatprep.subr.bf16.mxu0 0
        %401 = vmatpush1.bf16.xpose.msra.mxu0 0
        %402 = vmatprep.mubr.bf16.mxu0 %v253
        %403 = vmatmul.mubr.bf16.gmra.mrb[0].mxu0 %v252
        %v404 = vpop.f32.mrb[0].mxu0
        %v405 = vadd.f32 0.0, %v404
        %v406 = vpop.f32.mrb[0].mxu0
        %v407 = vpop.f32.mrb[0].mxu0
        %v408 = vadd.f32 0.0, %v407
        %v409 = vpop.f32.mrb[0].mxu0
        %410 = vmatprep.mubr.bf16.mxu0 %v255
        %411 = vmatmul.mubr.bf16.gmra.mrb[0].mxu0 %v254
        %v412 = vpop.f32.mrb[0].mxu0
        %v413 = vadd.f32 0.0, %v412
        %v414 = vpop.f32.mrb[0].mxu0
        %v415 = vpop.f32.mrb[0].mxu0
        %v416 = vadd.f32 0.0, %v415
        %v417 = vpop.f32.mrb[0].mxu0
        %418 = vmatprep.mubr.bf16.mxu0 %v257
        %419 = vmatmul.mubr.bf16.gmra.mrb[0].mxu0 %v256
        %v420 = vpop.f32.mrb[0].mxu0
        %v421 = vadd.f32 0.0, %v420
        %v422 = vpop.f32.mrb[0].mxu0
        %v423 = vpop.f32.mrb[0].mxu0
        %v424 = vadd.f32 0.0, %v423
        %v425 = vpop.f32.mrb[0].mxu0
        %426 = vmatprep.mubr.bf16.mxu0 %v259
        %427 = vmatmul.mubr.bf16.gmra.mrb[0].mxu0 %v258
        %v428 = vpop.f32.mrb[0].mxu0
        %v429 = vadd.f32 0.0, %v428
        %v430 = vpop.f32.mrb[0].mxu0
        %v431 = vpop.f32.mrb[0].mxu0
        %v432 = vadd.f32 0.0, %v431
        %v433 = vpop.f32.mrb[0].mxu0
        %434 = vdwg.mxu0
        %v435 = vld [vmem:[#allocation4] sm:$0xff]
        %v436 = vld [vmem:[#allocation4 + $0x8] sm:$0xff]
        %v437 = vld [vmem:[#allocation4 + $0x10] sm:$0xff]
        %v438 = vld [vmem:[#allocation4 + $0x18] sm:$0xff]
        %v439 = vld [vmem:[#allocation4 + $0x20] sm:$0xff]
        %v440 = vld [vmem:[#allocation4 + $0x28] sm:$0xff]
        %v441 = vld [vmem:[#allocation4 + $0x30] sm:$0xff]
        %v442 = vld [vmem:[#allocation4 + $0x38] sm:$0xff]
        %443 = vxpose.xlu0.b32.start [1/16] %v328, 128
        %444 = vxpose.xlu0.b32.cont [2/16] %v330, 128
        %445 = vxpose.xlu0.b32.cont [3/16] 0.0, 128
        %446 = vxpose.xlu0.b32.cont [4/16] 0.0, 128
        %447 = vxpose.xlu0.b32.cont [5/16] 0.0, 128
        %448 = vxpose.xlu0.b32.cont [6/16] 0.0, 128
        %449 = vxpose.xlu0.b32.cont [7/16] 0.0, 128
        %450 = vxpose.xlu0.b32.cont [8/16] 0.0, 128
        %451 = vxpose.xlu0.b32.cont [9/16] 0.0, 128
        %452 = vxpose.xlu0.b32.cont [10/16] 0.0, 128
        %453 = vxpose.xlu0.b32.cont [11/16] 0.0, 128
        %454 = vxpose.xlu0.b32.cont [12/16] 0.0, 128
        %455 = vxpose.xlu0.b32.cont [13/16] 0.0, 128
        %456 = vxpose.xlu0.b32.cont [14/16] 0.0, 128
        %457 = vxpose.xlu0.b32.cont [15/16] 0.0, 128
        %458 = vxpose.xlu0.b32.end [16/16] 0.0, 128
        %v459 = vpop.trf.xlu0
        %v460 = vpop.trf.xlu0
        %v461 = vpop.trf.xlu0
        %v462 = vpop.trf.xlu0
        %v463 = vpop.trf.xlu0
        %v464 = vpop.trf.xlu0
        %v465 = vpop.trf.xlu0
        %v466 = vpop.trf.xlu0
        %v467 = vpop.trf.xlu0
        %v468 = vpop.trf.xlu0
        %v469 = vpop.trf.xlu0
        %v470 = vpop.trf.xlu0
        %v471 = vpop.trf.xlu0
        %v472 = vpop.trf.xlu0
        %v473 = vpop.trf.xlu0
        %v474 = vpop.trf.xlu0
        %v475 = vlaneseq
        %v476 = vshrl.u32 %v475, 7
        %v477 = vsub.s32 0, %v476
        %v478 = vrot.slane %v459, %v477
        %v479 = vmul.f32 %v435, %v478
        %v480 = vmul.f32 %v436, %v478
        %v481 = vmul.f32 %v437, %v478
        %v482 = vmul.f32 %v438, %v478
        %v483 = vmul.f32 %v439, %v478
        %v484 = vmul.f32 %v440, %v478
        %v485 = vmul.f32 %v441, %v478
        %v486 = vmul.f32 %v442, %v478
        %v487 = vadd.f32 %v479, %v405
        %v488 = vadd.f32 %v480, %v408
        %v489 = vadd.f32 %v481, %v413
        %v490 = vadd.f32 %v482, %v416
        %v491 = vadd.f32 %v483, %v421
        %v492 = vadd.f32 %v484, %v424
        %v493 = vadd.f32 %v485, %v429
        %v494 = vadd.f32 %v486, %v432
        %vm495 = vcmask 130048
        %496 = vst.msk [vmem:[#allocation4] sm:$0xff] %vm495, %v487
        %497 = vst.msk [vmem:[#allocation4 + $0x8] sm:$0xff] %vm495, %v488
        %498 = vst.msk [vmem:[#allocation4 + $0x10] sm:$0xff] %vm495, %v489
        %499 = vst.msk [vmem:[#allocation4 + $0x18] sm:$0xff] %vm495, %v490
        %500 = vst.msk [vmem:[#allocation4 + $0x20] sm:$0xff] %vm495, %v491
        %501 = vst.msk [vmem:[#allocation4 + $0x28] sm:$0xff] %vm495, %v492
        %502 = vst.msk [vmem:[#allocation4 + $0x30] sm:$0xff] %vm495, %v493
        %503 = vst.msk [vmem:[#allocation4 + $0x38] sm:$0xff] %vm495, %v494
        %504 = vst.msk [vmem:[#allocation2] sm:$0xff] %vm365, %v323
        %505 = vst.msk [vmem:[#allocation2 + $0x8] sm:$0xff] %vm365, %v324
        // Predicated region
        $region41: #{tpu_custom_call.1} parent=27 // pred_check
          %p506 = pneg %p195
        $region42: #{tpu_custom_call.1} parent=27 // pred_check_branch
          %508 = sbr.rel (%p506) target = $region44
        $region43: #{tpu_custom_call.1} parent=27 // pred_region
          %v509 = vld [vmem:[#allocation3] sm:$0xff]
          %v510 = vld [vmem:[#allocation3 + $0x8] sm:$0xff]
          %v511 = vrcp.pop %v509
          %v512 = vmul.f32 1.0, %v511
          %v513 = vrcp.pop %v510
          %v514 = vmul.f32 1.0, %v513
          %v515 = vld [vmem:[#allocation4] sm:$0xff]
          %v516 = vld [vmem:[#allocation4 + $0x8] sm:$0xff]
          %v517 = vld [vmem:[#allocation4 + $0x10] sm:$0xff]
          %v518 = vld [vmem:[#allocation4 + $0x18] sm:$0xff]
          %v519 = vld [vmem:[#allocation4 + $0x20] sm:$0xff]
          %v520 = vld [vmem:[#allocation4 + $0x28] sm:$0xff]
          %v521 = vld [vmem:[#allocation4 + $0x30] sm:$0xff]
          %v522 = vld [vmem:[#allocation4 + $0x38] sm:$0xff]
          %523 = vxpose.xlu0.b32.start [1/16] %v512, 128
          %524 = vxpose.xlu0.b32.cont [2/16] %v514, 128
          %525 = vxpose.xlu0.b32.cont [3/16] 0.0, 128
          %526 = vxpose.xlu0.b32.cont [4/16] 0.0, 128
          %527 = vxpose.xlu0.b32.cont [5/16] 0.0, 128
          %528 = vxpose.xlu0.b32.cont [6/16] 0.0, 128
          %529 = vxpose.xlu0.b32.cont [7/16] 0.0, 128
          %530 = vxpose.xlu0.b32.cont [8/16] 0.0, 128
          %531 = vxpose.xlu0.b32.cont [9/16] 0.0, 128
          %532 = vxpose.xlu0.b32.cont [10/16] 0.0, 128
          %533 = vxpose.xlu0.b32.cont [11/16] 0.0, 128
          %534 = vxpose.xlu0.b32.cont [12/16] 0.0, 128
          %535 = vxpose.xlu0.b32.cont [13/16] 0.0, 128
          %536 = vxpose.xlu0.b32.cont [14/16] 0.0, 128
          %537 = vxpose.xlu0.b32.cont [15/16] 0.0, 128
          %538 = vxpose.xlu0.b32.end [16/16] 0.0, 128
          %v539 = vpop.trf.xlu0
          %v540 = vpop.trf.xlu0
          %v541 = vpop.trf.xlu0
          %v542 = vpop.trf.xlu0
          %v543 = vpop.trf.xlu0
          %v544 = vpop.trf.xlu0
          %v545 = vpop.trf.xlu0
          %v546 = vpop.trf.xlu0
          %v547 = vpop.trf.xlu0
          %v548 = vpop.trf.xlu0
          %v549 = vpop.trf.xlu0
          %v550 = vpop.trf.xlu0
          %v551 = vpop.trf.xlu0
          %v552 = vpop.trf.xlu0
          %v553 = vpop.trf.xlu0
          %v554 = vpop.trf.xlu0
          %v555 = vlaneseq
          %v556 = vshrl.u32 %v555, 7
          %v557 = vsub.s32 0, %v556
          %v558 = vrot.slane %v539, %v557
          %v559 = vmul.f32 %v515, %v558
          %v560 = vmul.f32 %v516, %v558
          %v561 = vmul.f32 %v517, %v558
          %v562 = vmul.f32 %v518, %v558
          %v563 = vmul.f32 %v519, %v558
          %v564 = vmul.f32 %v520, %v558
          %v565 = vmul.f32 %v521, %v558
          %v566 = vmul.f32 %v522, %v558
          %567 = vxpose.xlu0.b32.start [1/16] %v559, 128
          %568 = vxpose.xlu0.b32.cont [2/16] %v560, 128
          %569 = vxpose.xlu0.b32.cont [3/16] %v561, 128
          %570 = vxpose.xlu0.b32.cont [4/16] %v562, 128
          %571 = vxpose.xlu0.b32.cont [5/16] %v563, 128
          %572 = vxpose.xlu0.b32.cont [6/16] %v564, 128
          %573 = vxpose.xlu0.b32.cont [7/16] %v565, 128
          %574 = vxpose.xlu0.b32.cont [8/16] %v566, 128
          %575 = vxpose.xlu0.b32.cont [9/16] 0.0, 128
          %576 = vxpose.xlu0.b32.cont [10/16] 0.0, 128
          %577 = vxpose.xlu0.b32.cont [11/16] 0.0, 128
          %578 = vxpose.xlu0.b32.cont [12/16] 0.0, 128
          %579 = vxpose.xlu0.b32.cont [13/16] 0.0, 128
          %580 = vxpose.xlu0.b32.cont [14/16] 0.0, 128
          %581 = vxpose.xlu0.b32.cont [15/16] 0.0, 128
          %582 = vxpose.xlu0.b32.end [16/16] 0.0, 128
          %v583 = vpop.trf.xlu0
          %v584 = vpop.trf.xlu0
          %v585 = vpop.trf.xlu0
          %v586 = vpop.trf.xlu0
          %v587 = vpop.trf.xlu0
          %v588 = vpop.trf.xlu0
          %v589 = vpop.trf.xlu0
          %v590 = vpop.trf.xlu0
          %v591 = vpop.trf.xlu0
          %v592 = vpop.trf.xlu0
          %v593 = vpop.trf.xlu0
          %v594 = vpop.trf.xlu0
          %v595 = vpop.trf.xlu0
          %v596 = vpop.trf.xlu0
          %v597 = vpop.trf.xlu0
          %v598 = vpop.trf.xlu0
          %599 = vst.msk [vmem:[%s192] sm:$0xff] %vm268, %v583
          %600 = vst.msk [vmem:[%s192 + $0x8] sm:$0xff] %vm268, %v584
        $region44: #{tpu_custom_call.1} parent=27 // pred_fallthru
          _
        %s601 = sand.u32 %s89, 1
        %s602 = scalar_lea.sflag [#allocation7], %s601
        %s603 = sand.u32 %s89, 1
        %s604 = smul.addr %s603, 16
        %s605 = scalar_lea.vmem [#allocation10], %s604
        // Predicated region
        $region45: #{tpu_custom_call.1} parent=27 // pred_check
          %p606 = pneg %p99
        $region46: #{tpu_custom_call.1} parent=27 // pred_check_branch
          %608 = sbr.rel (%p606) target = $region48
        $region47: #{tpu_custom_call.1} parent=27 // pred_region
          %s610 = ssub.s32 256, 256
          %611 = vsyncadd %s602, %s610
          %s612 = smul.addr %s24, 2
          %s613 = smul.addr %s612, 128
          %s614 = scalar_lea.hbm %s2, %s613
          %s615 = sshll.u32 %s605, 4
          %s616 = int_to_ptr.vmem [resolvable:$true] %s615
          %621 = dma.vmem_to_hbm [thread:$0]  %s616, 256, %s614, %s602, 128, 128, 8
        $region48: #{tpu_custom_call.1} parent=27 // pred_fallthru
          _
      $region28: #{tpu_custom_call.1} parent=5 // pred_fallthru
        _
      %p622 = scmp.le.s32.totalorder 2, %s15
      // Predicated region
      $region49: #{tpu_custom_call.1} parent=5 // pred_check
        %p623 = pneg %p622
      $region50: #{tpu_custom_call.1} parent=5 // pred_check_branch
        %625 = sbr.rel (%p623) target = $region52
      $region51: #{tpu_custom_call.1} parent=5 // pred_region
        %s626 = ssub.s32 %s15, 2
        // Predicated region
        $region53: #{tpu_custom_call.1} parent=51 // pred_check
          %p627 = pneg %p105
        $region54: #{tpu_custom_call.1} parent=51 // pred_check_branch
          %629 = sbr.rel (%p627) target = $region56
        $region55: #{tpu_custom_call.1} parent=51 // pred_region
          %s630 = sand.u32 %s90, 1
          %s631 = scalar_lea.sflag [#allocation7], %s630
          %s632 = sand.u32 %s90, 1
          %s633 = smul.addr %s632, 16
          %s634 = scalar_lea.vmem [#allocation10], %s633
          %635 = dma.done %s631, 256
        $region56: #{tpu_custom_call.1} parent=51 // pred_fallthru
          _
      $region52: #{tpu_custom_call.1} parent=5 // pred_fallthru
        _
    $region6: #{tpu_custom_call.1} parent=1 // loop_footer
      %s19 = sadd.s32 1, %s15
    $region7: #{tpu_custom_call.1} parent=1 // loop_footer_branch
      %14 = sbr.rel target = $region3
    $region8: #{tpu_custom_call.1} parent=1 // loop_exit
      _
    %636 = vsyncpa [#allocation6], 1
    %s637 = scalar_lea.sflag [#allocation6], 1
    %638 = vsyncpa %s637, 1
    %639 = vsyncpa [#allocation9], 1
    %s640 = scalar_lea.sflag [#allocation9], 1
    %641 = vsyncpa %s640, 1
    %642 = vsyncpa [#allocation7], 1
    %s643 = scalar_lea.sflag [#allocation7], 1
    %644 = vsyncpa %s643, 1

</llo_original>
